<compile_context>
chip_gen: v5e
topology: v5e:2x2
jax: 0.10.0
libtpu: 0.0.40
codegen_flags: <defaults>
</compile_context>

<pallas_src>
import functools

import jax
import jax.numpy as jnp
from jax.experimental import pallas as pl
from jax.experimental.pallas import tpu as pltpu


def actor_kernel(x_ref, w1_ref, b1_ref, w2_ref, b2_ref, o_ref, *, action_dim):
    # ---- Linear 1 + ReLU : bf16 operands on the MXU, f32 accumulation ----
    x = x_ref[...].astype(jnp.bfloat16)                     # (TB, S)
    h = jnp.dot(x, w1_ref[...], preferred_element_type=jnp.float32) + b1_ref[...]
    h = jnp.maximum(h, 0.0)

    # ---- Linear 2 (w2 is zero-padded to a lane-dense width, pre-cast to bf16) ----
    logits = jnp.dot(h.astype(jnp.bfloat16), w2_ref[...],
                     preferred_element_type=jnp.float32) + b2_ref[...]

    # Mask padded lanes so softmax is only over the real action_dim columns.
    lane = jax.lax.broadcasted_iota(jnp.int32, logits.shape, 1)
    logits = jnp.where(lane < action_dim, logits, -jnp.inf)

    # ---- Numerically stable softmax over the last axis (f32 on the VPU/EUP) ----
    m = jnp.max(logits, axis=-1, keepdims=True)
    e = jnp.exp(logits - m)
    denom = jnp.sum(e, axis=-1, keepdims=True)
    # Exact divide: rows must sum to 1 for downstream sampling (approx=True was
    # only ~1e-3 accurate and failed the normalization check).
    o_ref[...] = (e / denom).astype(o_ref.dtype)


def actor_forward(state, w1, b1, w2, b2, *, batch_tile=1024):
    """state: (B, state_dim) f32 -> probs: (B, action_dim) f32."""
    B, S = state.shape
    H, A = w2.shape

    # Lane-dense padded output width (multiple of 128) -> unmasked vector stores.
    A_pad = 128 * pl.cdiv(A, 128)

    # Grid steps: at least 2 once B is big enough to split (feeds both v7x
    # TensorCores via the "parallel" axis); more steps if B exceeds batch_tile.
    if B >= 16:
        n_steps = max(2, pl.cdiv(B, batch_tile))
    else:
        n_steps = 1
    # Tight batch tile: round ceil(B / n_steps) up to a sublane multiple of 8.
    TB = 8 * pl.cdiv(pl.cdiv(B, n_steps), 8)
    B_pad = TB * n_steps

    # One-time O(weights) prep: bf16 weights (halves the weight DMA, removes the
    # per-step in-kernel casts); biases stay f32 for the f32 accumulate path.
    w1_bf = w1.astype(jnp.bfloat16)
    w2_bf = jnp.pad(w2, ((0, 0), (0, A_pad - A))).astype(jnp.bfloat16)
    b2_p = jnp.pad(b2, ((0, 0), (0, A_pad - A)))

    # Pad the batch only when needed (garbage rows are sliced off below).
    state_p = state if B_pad == B else jnp.pad(state, ((0, B_pad - B), (0, 0)))

    out = pl.pallas_call(
        functools.partial(actor_kernel, action_dim=A),
        out_shape=jax.ShapeDtypeStruct((B_pad, A_pad), jnp.float32),
        grid=(n_steps,),
        in_specs=[
            pl.BlockSpec((TB, S), lambda i: (i, 0)),       # per-step batch tile
            pl.BlockSpec((S, H), lambda i: (0, 0)),        # weights stay VMEM-resident
            pl.BlockSpec((1, H), lambda i: (0, 0)),
            pl.BlockSpec((H, A_pad), lambda i: (0, 0)),
            pl.BlockSpec((1, A_pad), lambda i: (0, 0)),
        ],
        out_specs=pl.BlockSpec((TB, A_pad), lambda i: (i, 0)),
        compiler_params=pltpu.CompilerParams(
            dimension_semantics=("parallel",)),            # shard batch across TCs (v7x)
    )(state_p, w1_bf, b1, w2_bf, b2_p)

    # Return exactly the torch-module shape. (A consumer that samples/argmaxes
    # could instead fuse on the padded slab and skip this copy.)
    if B_pad == B and A_pad == A:
        return out
    return out[:B, :A]


def init_actor_params(key, state_dim, action_dim, hidden_dim=128):
    """Deterministic init mimicking torch.nn.Linear (uniform +/- 1/sqrt(fan_in))."""
    k1, k2, k3, k4 = jax.random.split(key, 4)
    lim1 = 1.0 / jnp.sqrt(jnp.float32(state_dim))
    lim2 = 1.0 / jnp.sqrt(jnp.float32(hidden_dim))
    w1 = jax.random.uniform(k1, (state_dim, hidden_dim), jnp.float32, -lim1, lim1)
    b1 = jax.random.uniform(k2, (1, hidden_dim), jnp.float32, -lim1, lim1)
    w2 = jax.random.uniform(k3, (hidden_dim, action_dim), jnp.float32, -lim2, lim2)
    b2 = jax.random.uniform(k4, (1, action_dim), jnp.float32, -lim2, lim2)
    return w1, b1, w2, b2


def ref_forward(state, w1, b1, w2, b2):
    """Plain-JAX reference with the same bf16-operand / f32-accumulate matmuls."""
    h = jnp.dot(state.astype(jnp.bfloat16), w1.astype(jnp.bfloat16),
                preferred_element_type=jnp.float32) + b1
    h = jnp.maximum(h, 0.0)
    logits = jnp.dot(h.astype(jnp.bfloat16), w2.astype(jnp.bfloat16),
                     preferred_element_type=jnp.float32) + b2
    return jax.nn.softmax(logits, axis=-1)


if __name__ == "__main__":
    state_dim, action_dim, hidden_dim = 32, 8, 128

    key = jax.random.PRNGKey(0)
    kp, kx1, kx2 = jax.random.split(key, 3)
    w1, b1, w2, b2 = init_actor_params(kp, state_dim, action_dim, hidden_dim)

    # --- Small batch (matches the original tiny RL use-case): grid=(1,) path ---
    batch = 2
    state = jax.random.normal(kx1, (batch, state_dim), jnp.float32)
    probs = jax.block_until_ready(actor_forward(state, w1, b1, w2, b2))
    ref = ref_forward(state, w1, b1, w2, b2)
    assert probs.shape == (batch, action_dim)
    assert jnp.allclose(probs, ref, atol=2e-3, rtol=2e-2)
    assert jnp.allclose(jnp.sum(probs, axis=-1), 1.0, atol=2e-3)
    assert bool(jnp.all(probs >= 0.0))

    # --- Larger (non-multiple-of-tile) batch exercising grid>=2 "parallel" path ---
    big_batch = 37
    state_big = jax.random.normal(kx2, (big_batch, state_dim), jnp.float32)
    probs_big = jax.block_until_ready(actor_forward(state_big, w1, b1, w2, b2))
    ref_big = ref_forward(state_big, w1, b1, w2, b2)
    assert probs_big.shape == (big_batch, action_dim)
    assert jnp.allclose(probs_big, ref_big, atol=2e-3, rtol=2e-2)
    assert jnp.allclose(jnp.sum(probs_big, axis=-1), 1.0, atol=2e-3)

    print("KERNEL_OK")
</pallas_src>

<mosaic_0001>
module attributes {stable_mosaic.version = 11 : i64} {
  func.func @actor_kernel(%arg0: i32, %arg1: memref<8x32xf32, #tpu.memory_space<vmem>>, %arg2: memref<32x128xbf16, #tpu.memory_space<vmem>>, %arg3: memref<1x128xf32, #tpu.memory_space<vmem>>, %arg4: memref<128x128xbf16, #tpu.memory_space<vmem>>, %arg5: memref<1x128xf32, #tpu.memory_space<vmem>>, %arg6: memref<8x128xf32, #tpu.memory_space<vmem>>) attributes {dimension_semantics = [#tpu.dimension_semantics<parallel>], iteration_bounds = array<i64: 1>, scalar_prefetch = 0 : i64, scratch_operands = 0 : i64, tpu.core_type = #tpu.core_type<tc>, window_params = [{transform_indices = @transform_0, window_bounds = array<i64: 8, 32>}, {pipeline_mode = #tpu.pipeline_mode<synchronous>, transform_indices = @transform_1, window_bounds = array<i64: 32, 128>}, {pipeline_mode = #tpu.pipeline_mode<synchronous>, transform_indices = @transform_2, window_bounds = array<i64: 1, 128>}, {pipeline_mode = #tpu.pipeline_mode<synchronous>, transform_indices = @transform_3, window_bounds = array<i64: 128, 128>}, {pipeline_mode = #tpu.pipeline_mode<synchronous>, transform_indices = @transform_4, window_bounds = array<i64: 1, 128>}, {transform_indices = @transform_5, window_bounds = array<i64: 8, 128>}]} {
    %c0 = arith.constant 0 : index
    %c0_0 = arith.constant 0 : index
    %0 = vector.load %arg1[%c0, %c0_0] : memref<8x32xf32, #tpu.memory_space<vmem>>, vector<8x32xf32>
    %1 = arith.truncf %0 : vector<8x32xf32> to vector<8x32xbf16>
    %c0_1 = arith.constant 0 : index
    %c0_2 = arith.constant 0 : index
    %2 = vector.load %arg2[%c0_1, %c0_2] : memref<32x128xbf16, #tpu.memory_space<vmem>>, vector<32x128xbf16>
    %cst = arith.constant dense<0.000000e+00> : vector<8x128xf32>
    %3 = tpu.matmul %1, %2, %cst {dimension_numbers = #tpu.dot_dimension_numbers<[1], [0], [0], [1], [0, 0, 1, 1], [], []>} : vector<8x32xbf16>, vector<32x128xbf16>, vector<8x128xf32> -> vector<8x128xf32>
    %c0_3 = arith.constant 0 : index
    %c0_4 = arith.constant 0 : index
    %4 = vector.load %arg3[%c0_3, %c0_4] : memref<1x128xf32, #tpu.memory_space<vmem>>, vector<1x128xf32>
    %5 = vector.broadcast %4 : vector<1x128xf32> to vector<8x128xf32>
    %6 = arith.addf %3, %5 : vector<8x128xf32>
    %cst_5 = arith.constant 0.000000e+00 : f32
    %7 = vector.broadcast %cst_5 : f32 to vector<8x128xf32>
    %8 = arith.maximumf %6, %7 : vector<8x128xf32>
    %9 = arith.truncf %8 : vector<8x128xf32> to vector<8x128xbf16>
    %c0_6 = arith.constant 0 : index
    %c0_7 = arith.constant 0 : index
    %10 = vector.load %arg4[%c0_6, %c0_7] : memref<128x128xbf16, #tpu.memory_space<vmem>>, vector<128x128xbf16>
    %cst_8 = arith.constant dense<0.000000e+00> : vector<8x128xf32>
    %11 = tpu.matmul %9, %10, %cst_8 {dimension_numbers = #tpu.dot_dimension_numbers<[1], [0], [0], [1], [0, 0, 1, 1], [], []>} : vector<8x128xbf16>, vector<128x128xbf16>, vector<8x128xf32> -> vector<8x128xf32>
    %c0_9 = arith.constant 0 : index
    %c0_10 = arith.constant 0 : index
    %12 = vector.load %arg5[%c0_9, %c0_10] : memref<1x128xf32, #tpu.memory_space<vmem>>, vector<1x128xf32>
    %13 = vector.broadcast %12 : vector<1x128xf32> to vector<8x128xf32>
    %14 = arith.addf %11, %13 : vector<8x128xf32>
    %15 = tpu.iota {dimensions = array<i32: 1>} : vector<8x128xi32>
    %c8_i32 = arith.constant 8 : i32
    %16 = vector.broadcast %c8_i32 : i32 to vector<8x128xi32>
    %17 = arith.cmpi slt, %15, %16 : vector<8x128xi32>
    %cst_11 = arith.constant 0xFF800000 : f32
    %18 = vector.broadcast %cst_11 : f32 to vector<8x128xf32>
    %19 = arith.select %17, %14, %18 : vector<8x128xi1>, vector<8x128xf32>
    %cst_12 = arith.constant dense<0xFF800000> : vector<8xf32>
    %20 = vector.multi_reduction <maximumf>, %19, %cst_12 [1] : vector<8x128xf32> to vector<8xf32>
    %21 = vector.shape_cast %20 : vector<8xf32> to vector<8x1xf32>
    %22 = vector.broadcast %21 : vector<8x1xf32> to vector<8x128xf32>
    %23 = arith.subf %19, %22 : vector<8x128xf32>
    %24 = math.exp %23 : vector<8x128xf32>
    %cst_13 = arith.constant dense<0.000000e+00> : vector<8xf32>
    %25 = vector.multi_reduction <add>, %24, %cst_13 [1] : vector<8x128xf32> to vector<8xf32>
    %26 = vector.shape_cast %25 : vector<8xf32> to vector<8x1xf32>
    %27 = vector.broadcast %26 : vector<8x1xf32> to vector<8x128xf32>
    %28 = arith.divf %24, %27 : vector<8x128xf32>
    %c0_14 = arith.constant 0 : index
    %c0_15 = arith.constant 0 : index
    %29 = vector.load %arg6[%c0_14, %c0_15] : memref<8x128xf32, #tpu.memory_space<vmem>>, vector<8x128xf32>
    tpu.vector_store %arg6[%c0_14, %c0_15], %28 {strides = array<i32>} : memref<8x128xf32, #tpu.memory_space<vmem>>, vector<8x128xf32>,
    return
  }
  func.func @transform_0(%arg0: i32) -> (i32, i32) {
    %c0_i32 = arith.constant 0 : i32
    %c0_i32_0 = arith.constant 0 : i32
    return %arg0, %c0_i32 : i32, i32
  }
  func.func @transform_1(%arg0: i32) -> (i32, i32) {
    %c0_i32 = arith.constant 0 : i32
    %c0_i32_0 = arith.constant 0 : i32
    %c0_i32_1 = arith.constant 0 : i32
    return %c0_i32, %c0_i32_0 : i32, i32
  }
  func.func @transform_2(%arg0: i32) -> (i32, i32) {
    %c0_i32 = arith.constant 0 : i32
    %c0_i32_0 = arith.constant 0 : i32
    %c0_i32_1 = arith.constant 0 : i32
    return %c0_i32, %c0_i32_0 : i32, i32
  }
  func.func @transform_3(%arg0: i32) -> (i32, i32) {
    %c0_i32 = arith.constant 0 : i32
    %c0_i32_0 = arith.constant 0 : i32
    %c0_i32_1 = arith.constant 0 : i32
    return %c0_i32, %c0_i32_0 : i32, i32
  }
  func.func @transform_4(%arg0: i32) -> (i32, i32) {
    %c0_i32 = arith.constant 0 : i32
    %c0_i32_0 = arith.constant 0 : i32
    %c0_i32_1 = arith.constant 0 : i32
    return %c0_i32, %c0_i32_0 : i32, i32
  }
  func.func @transform_5(%arg0: i32) -> (i32, i32) {
    %c0_i32 = arith.constant 0 : i32
    %c0_i32_0 = arith.constant 0 : i32
    return %arg0, %c0_i32 : i32, i32
  }
}

</mosaic_0001>

<llo_original>
// kernel: tpu_custom_call.1
$region0: #{tpu_custom_call.1}
  #allocation0 [shape = 'u32[]', space=smem, size = 0x4, offset = 0x4, fixed_abs, tag = 'smem constant byte address 0x4 - core index']
  #allocation1 [shape = 'u32[72,128]{1,0:T(1,128)}', space=vmem, size = 0x9000, scoped, tag = 'internal scratch']
  %s0 = inlined_call_operand.hbm [shape: f32[8,32], index: 0, kind: input, shape index: {}]
  %s1 = inlined_call_operand.hbm [shape: bf16[32,128], index: 1, kind: input, shape index: {}]
  %s2 = inlined_call_operand.vmem [shape: f32[1,128], index: 2, kind: input, shape index: {}]
  %s3 = inlined_call_operand.hbm [shape: bf16[128,128], index: 3, kind: input, shape index: {}]
  %s4 = inlined_call_operand.vmem [shape: f32[1,128], index: 4, kind: input, shape index: {}]
  %s5 = inlined_call_operand.hbm [shape: f32[8,128], index: 5, kind: output, shape index: {}]
  %s6 = sld [smem:[#allocation0]]
  $region42: #{tpu_custom_call.1} parent=0
    _
  %s8 = ssub.s32 1, %s6
  %s9 = scalar_select 0, %s8, %s6
  $region1: #{tpu_custom_call.1} parent=0
    #allocation2 [shape = 'u8[4096]{0}', space=vmem, size = 0x1000, scoped, tag = 'input window, operand 0, single buffered']
    #allocation3 [shape = 's32[1]{0}', space=sflag, size = 0x4, scoped, tag = 'scoped memory for tpu_custom_call.1']
    #allocation4 [shape = 's32[1]{0}', space=sflag, size = 0x4, scoped, tag = 'scoped memory for tpu_custom_call.1']
    #allocation5 [shape = 'u8[8192]{0}', space=vmem, size = 0x2000, scoped, tag = 'input window, operand 1, single buffered']
    #allocation6 [shape = 's32[1]{0}', space=sflag, size = 0x4, scoped, tag = 'scoped memory for tpu_custom_call.1']
    #allocation7 [shape = 'u8[32768]{0}', space=vmem, size = 0x8000, scoped, tag = 'input window, operand 3, single buffered']
    #allocation8 [shape = 'u8[4096]{0}', space=vmem, size = 0x1000, scoped, tag = 'output window, operand 0, single buffered']
    %10 = vsyncpa [#allocation3], 0
    %11 = vsyncpa [#allocation6], 0
    %12 = vsyncpa [#allocation4], 0
    // Predicated region
    $region2: #{tpu_custom_call.1} parent=1 // pred_check
      _
    $region3: #{tpu_custom_call.1} parent=1 // pred_check_branch
      %14 = sbr.rel (0) target = $region5
    $region4: #{tpu_custom_call.1} parent=1 // pred_region
      %16 = vsyncadd [#allocation3], 0
      %s18 = sshll.u32 %s0, 4
      %s19 = int_to_ptr.hbm [resolvable:$true] %s18
      %s20 = sshll.u32 [#allocation2], 4
      %s21 = int_to_ptr.vmem [resolvable:$true] %s20
      %23 = dma.hbm_to_vmem [thread:$0]  %s19, 128, %s21, [#allocation3]
    $region5: #{tpu_custom_call.1} parent=1 // pred_fallthru
      _
    // Predicated region
    $region6: #{tpu_custom_call.1} parent=1 // pred_check
      _
    $region7: #{tpu_custom_call.1} parent=1 // pred_check_branch
      %25 = sbr.rel (0) target = $region9
    $region8: #{tpu_custom_call.1} parent=1 // pred_region
      %27 = vsyncadd [#allocation6], 0
      %s28 = sshll.u32 %s1, 4
      %s29 = int_to_ptr.hbm [resolvable:$true] %s28
      %s30 = sshll.u32 [#allocation5], 4
      %s31 = int_to_ptr.vmem [resolvable:$true] %s30
      %36 = dma.hbm_to_vmem [thread:$0]  %s29, 256, %s31, [#allocation6], 64, 64, 4
    $region9: #{tpu_custom_call.1} parent=1 // pred_fallthru
      _
    // Predicated region
    $region10: #{tpu_custom_call.1} parent=1 // pred_check
      _
    $region11: #{tpu_custom_call.1} parent=1 // pred_check_branch
      %38 = sbr.rel (0) target = $region13
    $region12: #{tpu_custom_call.1} parent=1 // pred_region
      _
    $region13: #{tpu_custom_call.1} parent=1 // pred_fallthru
      _
    // Predicated region
    $region14: #{tpu_custom_call.1} parent=1 // pred_check
      _
    $region15: #{tpu_custom_call.1} parent=1 // pred_check_branch
      %40 = sbr.rel (0) target = $region17
    $region16: #{tpu_custom_call.1} parent=1 // pred_region
      %42 = vsyncadd [#allocation6], 0
      %s43 = sshll.u32 %s3, 4
      %s44 = int_to_ptr.hbm [resolvable:$true] %s43
      %s45 = sshll.u32 [#allocation7], 4
      %s46 = int_to_ptr.vmem [resolvable:$true] %s45
      %51 = dma.hbm_to_vmem [thread:$0]  %s44, 1024, %s46, [#allocation6], 64, 64, 4
    $region17: #{tpu_custom_call.1} parent=1 // pred_fallthru
      _
    // Predicated region
    $region18: #{tpu_custom_call.1} parent=1 // pred_check
      _
    $region19: #{tpu_custom_call.1} parent=1 // pred_check_branch
      %53 = sbr.rel (0) target = $region21
    $region20: #{tpu_custom_call.1} parent=1 // pred_region
      _
    $region21: #{tpu_custom_call.1} parent=1 // pred_fallthru
      _
    // Predicated region
    $region22: #{tpu_custom_call.1} parent=1 // pred_check
      _
    $region23: #{tpu_custom_call.1} parent=1 // pred_check_branch
      %55 = sbr.rel (0) target = $region25
    $region24: #{tpu_custom_call.1} parent=1 // pred_region
      %57 = dma.done [#allocation3], 128
    $region25: #{tpu_custom_call.1} parent=1 // pred_fallthru
      _
    // Predicated region
    $region26: #{tpu_custom_call.1} parent=1 // pred_check
      _
    $region27: #{tpu_custom_call.1} parent=1 // pred_check_branch
      %59 = sbr.rel (0) target = $region29
    $region28: #{tpu_custom_call.1} parent=1 // pred_region
      %61 = dma.done [#allocation6], 256
    $region29: #{tpu_custom_call.1} parent=1 // pred_fallthru
      _
    // Predicated region
    $region30: #{tpu_custom_call.1} parent=1 // pred_check
      _
    $region31: #{tpu_custom_call.1} parent=1 // pred_check_branch
      %63 = sbr.rel (0) target = $region33
    $region32: #{tpu_custom_call.1} parent=1 // pred_region
      %65 = dma.done [#allocation6], 1024
    $region33: #{tpu_custom_call.1} parent=1 // pred_fallthru
      _
    %v67 = vld [vmem:[#allocation2] sm:$0xff]
    %v68 = vpack.c.bf16 %v67, %v67
    %v69 = vld [vmem:[#allocation5] sm:$0xf]
    %v70 = vld [vmem:[#allocation5 + $0x4] sm:$0xf]
    %v71 = vld [vmem:[#allocation5 + $0x8] sm:$0xf]
    %v72 = vld [vmem:[#allocation5 + $0xc] sm:$0xf]
    %v73 = vld [vmem:[%s2] sm:$0x1]
    %v75 = vperm.slane %v73, 0
    %v81 = vunpack.c.l.b16 %v69
    %v82 = vunpack.c.l.b16 %v70
    %v83 = vunpack.c.l.b16 %v71
    %v84 = vunpack.c.l.b16 %v72
    %v85 = vpack.c.b16 %v82, %v81
    %v86 = vpack.c.b16 %v84, %v83
    %vm89 = vcmask 261120
    %v91 = vsel %vm89, %v68, 0
    %93 = vmatpush.bf16.msra.mxu0 0
    %94 = vmatpush.bf16.msra.mxu0 0
    %95 = vmatpush.bf16.msra.mxu0 0
    %96 = vmatpush.bf16.msra.mxu0 0
    %97 = vmatpush.bf16.msra.mxu0 0
    %98 = vmatpush.bf16.msra.mxu0 0
    %99 = vmatpush.bf16.msra.mxu0 %v86
    %100 = vmatpush.bf16.msra.mxu0 %v85
    %101 = vmatmul.bf16.gmra.mxu0 %v91
    %v102 = vpop.f32.mrf.mxu0
    %v103 = vadd.f32 %v75, %v102
    %v104 = vpop.f32.mrf.mxu0
    %105 = vdwg.mxu0
    %v106 = vmax.f32 %v103, 0.0
    %v107 = vpack.c.bf16 %v106, %v106
    %v108 = vld [vmem:[#allocation7] sm:$0xf]
    %v109 = vld [vmem:[#allocation7 + $0x4] sm:$0xf]
    %v110 = vld [vmem:[#allocation7 + $0x8] sm:$0xf]
    %v111 = vld [vmem:[#allocation7 + $0xc] sm:$0xf]
    %v112 = vld [vmem:[#allocation7 + $0x10] sm:$0xf]
    %v113 = vld [vmem:[#allocation7 + $0x14] sm:$0xf]
    %v114 = vld [vmem:[#allocation7 + $0x18] sm:$0xf]
    %v115 = vld [vmem:[#allocation7 + $0x1c] sm:$0xf]
    %v116 = vld [vmem:[#allocation7 + $0x20] sm:$0xf]
    %v117 = vld [vmem:[#allocation7 + $0x24] sm:$0xf]
    %v118 = vld [vmem:[#allocation7 + $0x28] sm:$0xf]
    %v119 = vld [vmem:[#allocation7 + $0x2c] sm:$0xf]
    %v120 = vld [vmem:[#allocation7 + $0x30] sm:$0xf]
    %v121 = vld [vmem:[#allocation7 + $0x34] sm:$0xf]
    %v122 = vld [vmem:[#allocation7 + $0x38] sm:$0xf]
    %v123 = vld [vmem:[#allocation7 + $0x3c] sm:$0xf]
    %v124 = vld [vmem:[%s4] sm:$0x1]
    %v126 = vperm.slane %v124, 0
    %v144 = vunpack.c.l.b16 %v108
    %v145 = vunpack.c.l.b16 %v109
    %v146 = vunpack.c.l.b16 %v110
    %v147 = vunpack.c.l.b16 %v111
    %v148 = vunpack.c.l.b16 %v112
    %v149 = vunpack.c.l.b16 %v113
    %v150 = vunpack.c.l.b16 %v114
    %v151 = vunpack.c.l.b16 %v115
    %v152 = vunpack.c.l.b16 %v116
    %v153 = vunpack.c.l.b16 %v117
    %v154 = vunpack.c.l.b16 %v118
    %v155 = vunpack.c.l.b16 %v119
    %v156 = vunpack.c.l.b16 %v120
    %v157 = vunpack.c.l.b16 %v121
    %v158 = vunpack.c.l.b16 %v122
    %v159 = vunpack.c.l.b16 %v123
    %v160 = vpack.c.b16 %v145, %v144
    %v161 = vpack.c.b16 %v147, %v146
    %v162 = vpack.c.b16 %v149, %v148
    %v163 = vpack.c.b16 %v151, %v150
    %v164 = vpack.c.b16 %v153, %v152
    %v165 = vpack.c.b16 %v155, %v154
    %v166 = vpack.c.b16 %v157, %v156
    %v167 = vpack.c.b16 %v159, %v158
    %176 = vmatpush.bf16.msra.mxu0 %v167
    %177 = vmatpush.bf16.msra.mxu0 %v166
    %178 = vmatpush.bf16.msra.mxu0 %v165
    %179 = vmatpush.bf16.msra.mxu0 %v164
    %180 = vmatpush.bf16.msra.mxu0 %v163
    %181 = vmatpush.bf16.msra.mxu0 %v162
    %182 = vmatpush.bf16.msra.mxu0 %v161
    %183 = vmatpush.bf16.msra.mxu0 %v160
    %184 = vmatmul.bf16.gmra.mxu0 %v107
    %v185 = vpop.f32.mrf.mxu0
    %v186 = vadd.f32 %v126, %v185
    %v187 = vpop.f32.mrf.mxu0
    %188 = vdwg.mxu0
    %v189 = vlaneseq
    %v190 = vand.u32 %v189, 127
    %vm191 = vcmp.lt.s32.totalorder %v190, 8
    %v192 = vsel %vm191, %v186, -inf
    %193 = vmax.xlane.f32.xlu0 %v192
    %v194 = vpop.xlane.xlu0 %193
    %v195 = vsub.f32 %v192, %v194
    %v196 = vmul.f32 %v195, 1.442695
    %v197 = vpow.pop %v196
    %198 = vadd.xlane.f32.xlu0 %v197
    %v199 = vpop.xlane.xlu0 %198
    %v200 = vrcp.pop %v199
    %v201 = vmul.f32 %v199, %v200
    %v202 = vsub.f32 1.0, %v201
    %v203 = vmul.f32 %v200, %v202
    %v204 = vadd.f32 %v200, %v203
    %vm205 = vweird.f32 %v199
    %vm206 = vweird.f32 %v200
    %vm207 = vmor %vm205, %vm206
    %v208 = vsel %vm207, %v200, %v204
    %v209 = vand.u32 2147483647, %v199
    %vm210 = vcmp.eq.f32.partialorder %v209, 8.507059e+37
    %v211 = vand.u32 %v199, 2147483648
    %v212 = vor.u32 1.1754944e-38, %v211
    %v213 = vsel %vm210, %v212, %v208
    %v214 = vmul.f32 %v197, %v213
    %215 = vst [vmem:[#allocation8] sm:$0xff] %v214
    // Predicated region
    $region34: #{tpu_custom_call.1} parent=1 // pred_check
      _
    $region35: #{tpu_custom_call.1} parent=1 // pred_check_branch
      %217 = sbr.rel (0) target = $region37
    $region36: #{tpu_custom_call.1} parent=1 // pred_region
      %219 = vsyncadd [#allocation4], 0
      %s221 = sshll.u32 [#allocation8], 4
      %s222 = int_to_ptr.vmem [resolvable:$true] %s221
      %s223 = sshll.u32 %s5, 4
      %s224 = int_to_ptr.hbm [resolvable:$true] %s223
      %226 = dma.vmem_to_hbm [thread:$0]  %s222, 128, %s224, [#allocation4]
    $region37: #{tpu_custom_call.1} parent=1 // pred_fallthru
      _
    // Predicated region
    $region38: #{tpu_custom_call.1} parent=1 // pred_check
      _
    $region39: #{tpu_custom_call.1} parent=1 // pred_check_branch
      %228 = sbr.rel (0) target = $region41
    $region40: #{tpu_custom_call.1} parent=1 // pred_region
      %230 = dma.done [#allocation4], 128
    $region41: #{tpu_custom_call.1} parent=1 // pred_fallthru
      _
    %231 = vsyncpa [#allocation3], 1
    %232 = vsyncpa [#allocation6], 1
    %233 = vsyncpa [#allocation4], 1

</llo_original>
